<compile_context>
chip_gen: v7x
topology: tpu7x:2x2x1
jax: 0.10.0
libtpu: 0.0.40
codegen_flags: <defaults>
</compile_context>

<pallas_src>
import functools

import jax
import jax.numpy as jnp
from jax.experimental import pallas as pl
from jax.experimental.pallas import tpu as pltpu


def _discriminator_kernel(x_ref, w1_ref, b1_ref, w2_ref, b2_ref, w3_ref, b3_ref,
                          o_ref):
    # Layer 1: Linear + sigmoid (MXU matmul, f32 accumulation)
    h = jnp.dot(x_ref[...], w1_ref[...], preferred_element_type=jnp.float32)
    h = jax.nn.sigmoid(h + b1_ref[...])
    # Layer 2: Linear + sigmoid
    h = jnp.dot(h.astype(w2_ref.dtype), w2_ref[...],
                preferred_element_type=jnp.float32)
    h = jax.nn.sigmoid(h + b2_ref[...])
    # Layer 3: Linear + sigmoid
    h = jnp.dot(h.astype(w3_ref.dtype), w3_ref[...],
                preferred_element_type=jnp.float32)
    h = jax.nn.sigmoid(h + b3_ref[...])
    o_ref[...] = h.astype(o_ref.dtype)


def _auto_block_batch(B, target=512):
    """Pick a batch tile: big (amortize per-step overhead, fill MXU M-dim),
    multiple of 8 (sublane), divides B, and grid >= 2 when possible so both
    v7x TensorCores get work via the 'parallel' batch axis."""
    if B <= 16:
        return B
    for bb in (1024, 512, 256, 128, 64, 32, 16, 8):
        if bb <= target and B % bb == 0 and B // bb >= 2:
            return bb
    return B  # fall back to a single full-batch tile


@functools.partial(jax.jit, static_argnames=("block_batch", "vmem_limit_bytes"))
def discriminator_forward(x, params, *, block_batch=None, vmem_limit_bytes=None):
    """Fused 3-layer MLP forward pass.

    x:      (B, input_size) float32 or bfloat16
    params: dict with w1 (in,h), b1 (1,h), w2 (h,h), b2 (1,h),
            w3 (h,out), b3 (1,out); weights may be f32 or bf16, biases f32.
    """
    w1, b1 = params["w1"], params["b1"]
    w2, b2 = params["w2"], params["b2"]
    w3, b3 = params["w3"], params["b3"]

    B, in_size = x.shape
    hidden = w1.shape[1]
    out_size = w3.shape[1]

    if block_batch is None:
        block_batch = _auto_block_batch(B)
    assert B % block_batch == 0, "batch must be divisible by block_batch"
    assert block_batch == B or block_batch % 8 == 0, \
        "block_batch must be a multiple of 8 (sublane) or the full batch"

    grid = (B // block_batch,)

    # Weights / biases are small: full-array blocks with constant index maps
    # (never re-fetched across the batch grid axis); only activations tile.
    in_specs = [
        pl.BlockSpec((block_batch, in_size), lambda i: (i, 0)),   # x
        pl.BlockSpec((in_size, hidden),       lambda i: (0, 0)),  # w1
        pl.BlockSpec((1, hidden),             lambda i: (0, 0)),  # b1
        pl.BlockSpec((hidden, hidden),        lambda i: (0, 0)),  # w2
        pl.BlockSpec((1, hidden),             lambda i: (0, 0)),  # b2
        pl.BlockSpec((hidden, out_size),      lambda i: (0, 0)),  # w3
        pl.BlockSpec((1, out_size),           lambda i: (0, 0)),  # b3
    ]
    out_specs = pl.BlockSpec((block_batch, out_size), lambda i: (i, 0))

    # Advisory cost so XLA schedules this call with a realistic weight
    # (matters inside the surrounding GAN training loop).
    flops = 2 * B * (in_size * hidden + hidden * hidden + hidden * out_size)
    transcendentals = B * (2 * hidden + out_size)          # 3 sigmoids
    bytes_accessed = (
        x.size * x.dtype.itemsize
        + sum(int(p.size) * p.dtype.itemsize for p in (w1, b1, w2, b2, w3, b3))
        + B * out_size * 4)
    cost = pl.CostEstimate(flops=flops, transcendentals=transcendentals,
                           bytes_accessed=bytes_accessed)

    cp_kwargs = dict(dimension_semantics=("parallel",))
    if vmem_limit_bytes is not None:
        # Re-derive for v7x (64 MiB physical / 32 MiB default scoped) if tiles
        # or hidden_size are scaled up.
        cp_kwargs["vmem_limit_bytes"] = vmem_limit_bytes

    return pl.pallas_call(
        _discriminator_kernel,
        out_shape=jax.ShapeDtypeStruct((B, out_size), jnp.float32),
        grid_spec=pltpu.PrefetchScalarGridSpec(
            num_scalar_prefetch=0,
            grid=grid,
            in_specs=in_specs,
            out_specs=out_specs,
        ),
        compiler_params=pltpu.CompilerParams(**cp_kwargs),
        cost_estimate=cost,
    )(x, w1, b1, w2, b2, w3, b3)


def init_params(key, input_size, hidden_size, output_size):
    """Deterministic synthetic parameter init (PyTorch-like uniform fan-in)."""
    ks = jax.random.split(key, 6)

    def uinit(k, shape, fan_in):
        bound = 1.0 / jnp.sqrt(fan_in)
        return jax.random.uniform(k, shape, jnp.float32, -bound, bound)

    return {
        "w1": uinit(ks[0], (input_size, hidden_size), input_size),
        "b1": uinit(ks[1], (1, hidden_size), input_size),
        "w2": uinit(ks[2], (hidden_size, hidden_size), hidden_size),
        "b2": uinit(ks[3], (1, hidden_size), hidden_size),
        "w3": uinit(ks[4], (hidden_size, output_size), hidden_size),
        "b3": uinit(ks[5], (1, output_size), hidden_size),
    }


def reference_forward(x, params):
    h = jax.nn.sigmoid(x.astype(jnp.float32) @ params["w1"].astype(jnp.float32)
                       + params["b1"])
    h = jax.nn.sigmoid(h @ params["w2"].astype(jnp.float32) + params["b2"])
    return jax.nn.sigmoid(h @ params["w3"].astype(jnp.float32) + params["b3"])


if __name__ == "__main__":
    # Shapes consistent with the Gauss GAN discriminator usage; batch large
    # enough to exercise the tiled (grid >= 2) path.
    batch, input_size, hidden_size, output_size = 256, 16, 32, 1

    key = jax.random.PRNGKey(0)
    k_x, k_p = jax.random.split(key)
    x = jax.random.normal(k_x, (batch, input_size), jnp.float32)
    params = init_params(k_p, input_size, hidden_size, output_size)

    # f32 path (default): auto block_batch -> 128-row tiles, grid of 2.
    out = discriminator_forward(x, params)
    out = jax.block_until_ready(out)

    ref = reference_forward(x, params)
    assert out.shape == (batch, output_size)
    assert jnp.allclose(out, ref, atol=1e-5, rtol=1e-5), "f32 mismatch vs reference"

    # Optional bf16 matmul-input path (f32 accumulation + sigmoid inside kernel).
    x_bf = x.astype(jnp.bfloat16)
    params_bf = dict(params)
    for name in ("w1", "w2", "w3"):
        params_bf[name] = params[name].astype(jnp.bfloat16)
    out_bf = discriminator_forward(x_bf, params_bf)
    out_bf = jax.block_until_ready(out_bf)
    assert out_bf.shape == (batch, output_size)
    assert jnp.allclose(out_bf, ref, atol=3e-2, rtol=3e-2), "bf16 mismatch vs reference"

    print("KERNEL_OK")
</pallas_src>

<mosaic_0001>
module attributes {stable_mosaic.version = 11 : i64} {
  func.func @_discriminator_kernel(%arg0: i32, %arg1: memref<128x16xf32, #tpu.memory_space<vmem>>, %arg2: memref<16x32xf32, #tpu.memory_space<vmem>>, %arg3: memref<1x32xf32, #tpu.memory_space<vmem>>, %arg4: memref<32x32xf32, #tpu.memory_space<vmem>>, %arg5: memref<1x32xf32, #tpu.memory_space<vmem>>, %arg6: memref<32x1xf32, #tpu.memory_space<vmem>>, %arg7: memref<1x1xf32, #tpu.memory_space<vmem>>, %arg8: memref<128x1xf32, #tpu.memory_space<vmem>>) attributes {dimension_semantics = [#tpu.dimension_semantics<parallel>], iteration_bounds = array<i64: 2>, scalar_prefetch = 0 : i64, scratch_operands = 0 : i64, tpu.core_type = #tpu.core_type<tc>, window_params = [{transform_indices = @transform_0, window_bounds = array<i64: 128, 16>}, {pipeline_mode = #tpu.pipeline_mode<synchronous>, transform_indices = @transform_1, window_bounds = array<i64: 16, 32>}, {pipeline_mode = #tpu.pipeline_mode<synchronous>, transform_indices = @transform_2, window_bounds = array<i64: 1, 32>}, {pipeline_mode = #tpu.pipeline_mode<synchronous>, transform_indices = @transform_3, window_bounds = array<i64: 32, 32>}, {pipeline_mode = #tpu.pipeline_mode<synchronous>, transform_indices = @transform_4, window_bounds = array<i64: 1, 32>}, {pipeline_mode = #tpu.pipeline_mode<synchronous>, transform_indices = @transform_5, window_bounds = array<i64: 32, 1>}, {pipeline_mode = #tpu.pipeline_mode<synchronous>, transform_indices = @transform_6, window_bounds = array<i64: 1, 1>}, {transform_indices = @transform_7, window_bounds = array<i64: 128, 1>}]} {
    %c0 = arith.constant 0 : index
    %c0_0 = arith.constant 0 : index
    %0 = vector.load %arg1[%c0, %c0_0] : memref<128x16xf32, #tpu.memory_space<vmem>>, vector<128x16xf32>
    %c0_1 = arith.constant 0 : index
    %c0_2 = arith.constant 0 : index
    %1 = vector.load %arg2[%c0_1, %c0_2] : memref<16x32xf32, #tpu.memory_space<vmem>>, vector<16x32xf32>
    %cst = arith.constant dense<0.000000e+00> : vector<128x32xf32>
    %2 = tpu.matmul %0, %1, %cst {dimension_numbers = #tpu.dot_dimension_numbers<[1], [0], [0], [1], [0, 0, 1, 1], [], []>} : vector<128x16xf32>, vector<16x32xf32>, vector<128x32xf32> -> vector<128x32xf32>
    %c0_3 = arith.constant 0 : index
    %c0_4 = arith.constant 0 : index
    %3 = vector.load %arg3[%c0_3, %c0_4] : memref<1x32xf32, #tpu.memory_space<vmem>>, vector<1x32xf32>
    %4 = vector.broadcast %3 : vector<1x32xf32> to vector<128x32xf32>
    %5 = arith.addf %2, %4 : vector<128x32xf32>
    %6 = arith.negf %5 : vector<128x32xf32>
    %7 = math.exp %6 : vector<128x32xf32>
    %cst_5 = arith.constant 1.000000e+00 : f32
    %8 = vector.broadcast %cst_5 : f32 to vector<128x32xf32>
    %9 = arith.addf %8, %7 : vector<128x32xf32>
    %10 = arith.divf %8, %9 : vector<128x32xf32>
    %c0_6 = arith.constant 0 : index
    %c0_7 = arith.constant 0 : index
    %11 = vector.load %arg4[%c0_6, %c0_7] : memref<32x32xf32, #tpu.memory_space<vmem>>, vector<32x32xf32>
    %cst_8 = arith.constant dense<0.000000e+00> : vector<128x32xf32>
    %12 = tpu.matmul %10, %11, %cst_8 {dimension_numbers = #tpu.dot_dimension_numbers<[1], [0], [0], [1], [0, 0, 1, 1], [], []>} : vector<128x32xf32>, vector<32x32xf32>, vector<128x32xf32> -> vector<128x32xf32>
    %c0_9 = arith.constant 0 : index
    %c0_10 = arith.constant 0 : index
    %13 = vector.load %arg5[%c0_9, %c0_10] : memref<1x32xf32, #tpu.memory_space<vmem>>, vector<1x32xf32>
    %14 = vector.broadcast %13 : vector<1x32xf32> to vector<128x32xf32>
    %15 = arith.addf %12, %14 : vector<128x32xf32>
    %16 = arith.negf %15 : vector<128x32xf32>
    %17 = math.exp %16 : vector<128x32xf32>
    %cst_11 = arith.constant 1.000000e+00 : f32
    %18 = vector.broadcast %cst_11 : f32 to vector<128x32xf32>
    %19 = arith.addf %18, %17 : vector<128x32xf32>
    %20 = arith.divf %18, %19 : vector<128x32xf32>
    %c0_12 = arith.constant 0 : index
    %c0_13 = arith.constant 0 : index
    %21 = vector.load %arg6[%c0_12, %c0_13] : memref<32x1xf32, #tpu.memory_space<vmem>>, vector<32x1xf32>
    %cst_14 = arith.constant dense<0.000000e+00> : vector<128x1xf32>
    %22 = tpu.matmul %20, %21, %cst_14 {dimension_numbers = #tpu.dot_dimension_numbers<[1], [0], [0], [1], [0, 0, 1, 1], [], []>} : vector<128x32xf32>, vector<32x1xf32>, vector<128x1xf32> -> vector<128x1xf32>
    %c0_15 = arith.constant 0 : index
    %c0_16 = arith.constant 0 : index
    %23 = vector.load %arg7[%c0_15, %c0_16] : memref<1x1xf32, #tpu.memory_space<vmem>>, vector<1x1xf32>
    %24 = vector.broadcast %23 : vector<1x1xf32> to vector<128x1xf32>
    %25 = arith.addf %22, %24 : vector<128x1xf32>
    %26 = arith.negf %25 : vector<128x1xf32>
    %27 = math.exp %26 : vector<128x1xf32>
    %cst_17 = arith.constant 1.000000e+00 : f32
    %28 = vector.broadcast %cst_17 : f32 to vector<128x1xf32>
    %29 = arith.addf %28, %27 : vector<128x1xf32>
    %30 = arith.divf %28, %29 : vector<128x1xf32>
    %c0_18 = arith.constant 0 : index
    %c0_19 = arith.constant 0 : index
    %31 = vector.load %arg8[%c0_18, %c0_19] : memref<128x1xf32, #tpu.memory_space<vmem>>, vector<128x1xf32>
    tpu.vector_store %arg8[%c0_18, %c0_19], %30 {strides = array<i32>} : memref<128x1xf32, #tpu.memory_space<vmem>>, vector<128x1xf32>,
    return
  }
  func.func @transform_0(%arg0: i32) -> (i32, i32) {
    %c0_i32 = arith.constant 0 : i32
    %c0_i32_0 = arith.constant 0 : i32
    return %arg0, %c0_i32 : i32, i32
  }
  func.func @transform_1(%arg0: i32) -> (i32, i32) {
    %c0_i32 = arith.constant 0 : i32
    %c0_i32_0 = arith.constant 0 : i32
    %c0_i32_1 = arith.constant 0 : i32
    return %c0_i32, %c0_i32_0 : i32, i32
  }
  func.func @transform_2(%arg0: i32) -> (i32, i32) {
    %c0_i32 = arith.constant 0 : i32
    %c0_i32_0 = arith.constant 0 : i32
    %c0_i32_1 = arith.constant 0 : i32
    return %c0_i32, %c0_i32_0 : i32, i32
  }
  func.func @transform_3(%arg0: i32) -> (i32, i32) {
    %c0_i32 = arith.constant 0 : i32
    %c0_i32_0 = arith.constant 0 : i32
    %c0_i32_1 = arith.constant 0 : i32
    return %c0_i32, %c0_i32_0 : i32, i32
  }
  func.func @transform_4(%arg0: i32) -> (i32, i32) {
    %c0_i32 = arith.constant 0 : i32
    %c0_i32_0 = arith.constant 0 : i32
    %c0_i32_1 = arith.constant 0 : i32
    return %c0_i32, %c0_i32_0 : i32, i32
  }
  func.func @transform_5(%arg0: i32) -> (i32, i32) {
    %c0_i32 = arith.constant 0 : i32
    %c0_i32_0 = arith.constant 0 : i32
    %c0_i32_1 = arith.constant 0 : i32
    return %c0_i32, %c0_i32_0 : i32, i32
  }
  func.func @transform_6(%arg0: i32) -> (i32, i32) {
    %c0_i32 = arith.constant 0 : i32
    %c0_i32_0 = arith.constant 0 : i32
    %c0_i32_1 = arith.constant 0 : i32
    return %c0_i32, %c0_i32_0 : i32, i32
  }
  func.func @transform_7(%arg0: i32) -> (i32, i32) {
    %c0_i32 = arith.constant 0 : i32
    %c0_i32_0 = arith.constant 0 : i32
    return %arg0, %c0_i32 : i32, i32
  }
}

</mosaic_0001>

<llo_original>
// kernel: discriminator_forward.1
$region0: #{discriminator_forward.1}
  #allocation0 [shape = 'u32[]', space=smem, size = 0x4, offset = 0x4, fixed_abs, tag = 'smem constant byte address 0x4 - core index']
  #allocation1 [shape = 'u32[144,128]{1,0:T(1,128)}', space=vmem, size = 0x12000, scoped, tag = 'internal scratch']
  #allocation2 [shape = 'f32[1,1]{1,0:T(1,128)S(1)}', space=vmem, size = 0x200, scoped, tag = 'scoped memory for discriminator_forward.1']
  %s0 = inlined_call_operand.vmem [shape: f32[256,16], index: 0, kind: input, shape index: {}]
  %s1 = inlined_call_operand.vmem [shape: f32[16,32], index: 1, kind: input, shape index: {}]
  %s2 = inlined_call_operand.vmem [shape: f32[1,32], index: 2, kind: input, shape index: {}]
  %s3 = inlined_call_operand.vmem [shape: f32[32,32], index: 3, kind: input, shape index: {}]
  %s4 = inlined_call_operand.vmem [shape: f32[1,32], index: 4, kind: input, shape index: {}]
  %s5 = inlined_call_operand.vmem [shape: f32[32,1], index: 5, kind: input, shape index: {}]
  %s6 = inlined_call_operand.<no memory space> [shape: f32[1,1], index: 6, kind: input, shape index: {}]
  %s7 = inlined_call_operand.vmem [shape: f32[256,1], index: 7, kind: output, shape index: {}]
  %s8 = sld [smem:[#allocation0]]
  $region61: #{discriminator_forward.1} parent=0
    _
  %s10 = ssub.s32 1, %s8
  %s11 = scalar_select 0, %s10, %s8
  %v12 = vstv %s6
  %13 = vst [vmem:[#allocation2] sm:$0x1] %v12
  loop: start=0, step=1, limit=4
  $region2: #{discriminator_forward.1} parent=0 // loop_pre_header
    _
  $region3: #{discriminator_forward.1} parent=0 // loop_header
    %s15 = sphi 0, %s19
    %p16 = scmp.ge.s32.totalorder %s15, 4
    %s25 = sphi 0, %s27
    %s28 = sphi 0, %s25
    %s29 = sphi 0, %s28
    %s45 = sphi 0, %s29
    %s49 = sphi 0, %s49
    %s51 = sphi 0, %s49
    %s52 = sphi 0, %s51
    %s66 = sphi 0, %s52
    %s70 = sphi 0, %s70
    %s72 = sphi 0, %s70
    %s73 = sphi 0, %s72
    %s87 = sphi 0, %s73
    %s91 = sphi 0, %s91
    %s93 = sphi 0, %s91
    %s94 = sphi 0, %s93
    %s108 = sphi 0, %s94
    %s112 = sphi 0, %s112
    %s114 = sphi 0, %s112
    %s115 = sphi 0, %s114
    %s129 = sphi 0, %s115
    %s133 = sphi 0, %s133
    %s135 = sphi 0, %s133
    %s136 = sphi 0, %s135
    %s150 = sphi 0, %s136
    %s154 = sphi 0, %s154
    %s156 = sphi 0, %s154
    %s157 = sphi 0, %s156
    %s171 = sphi 0, %s157
    %s177 = sphi 0, %s179
    %s180 = sphi 0, %s177
    %s181 = sphi 0, %s180
    %s197 = sphi 0, %s181
  $region4: #{discriminator_forward.1} parent=0 // loop_header_branch
    %18 = sbr.rel (%p16) target = $region8
  $region5: #{discriminator_forward.1} parent=0 // loop_body
    %s20 = ssub.s32 %s15, 1
    %s21 = ssub.s32 %s15, 2
    %s22 = sadd.s32 %s15, 1
    %s23 = ssub.s32 %s15, %s22
    %p24 = scmp.eq.s32.totalorder %s23, 0
    %s26 = sadd.s32 %s25, 1
    %s27 = scalar_select %p24, %s25, %s26
    %p30 = pneg %p24
    %p31 = scmp.eq.s32.totalorder %s15, 1
    %p32 = por %p30, %p31
    %p33 = scmp.ne.s32.totalorder %s25, %s28
    %p34 = scmp.eq.s32.totalorder %s15, 0
    %p35 = por %p33, %p34
    %p36 = scmp.ne.s32.totalorder %s25, %s28
    %p37 = scmp.eq.s32.totalorder %s20, 1
    %p38 = por %p36, %p37
    %p39 = scmp.ne.s32.totalorder %s28, %s29
    %p40 = scmp.eq.s32.totalorder %s20, 0
    %p41 = por %p39, %p40
    %p42 = scmp.ne.s32.totalorder %s28, %s29
    %p43 = scmp.eq.s32.totalorder %s21, 1
    %p44 = por %p42, %p43
    %p46 = scmp.ne.s32.totalorder %s29, %s45
    %p47 = scmp.eq.s32.totalorder %s21, 0
    %p48 = por %p46, %p47
    %s50 = sadd.s32 %s49, 1
    %p53 = scmp.eq.s32.totalorder %s15, 1
    %p54 = scmp.ne.s32.totalorder %s49, %s51
    %p55 = scmp.eq.s32.totalorder %s15, 0
    %p56 = por %p54, %p55
    %p57 = scmp.ne.s32.totalorder %s49, %s51
    %p58 = scmp.eq.s32.totalorder %s20, 1
    %p59 = por %p57, %p58
    %p60 = scmp.ne.s32.totalorder %s51, %s52
    %p61 = scmp.eq.s32.totalorder %s20, 0
    %p62 = por %p60, %p61
    %p63 = scmp.ne.s32.totalorder %s51, %s52
    %p64 = scmp.eq.s32.totalorder %s21, 1
    %p65 = por %p63, %p64
    %p67 = scmp.ne.s32.totalorder %s52, %s66
    %p68 = scmp.eq.s32.totalorder %s21, 0
    %p69 = por %p67, %p68
    %s71 = sadd.s32 %s70, 1
    %p74 = scmp.eq.s32.totalorder %s15, 1
    %p75 = scmp.ne.s32.totalorder %s70, %s72
    %p76 = scmp.eq.s32.totalorder %s15, 0
    %p77 = por %p75, %p76
    %p78 = scmp.ne.s32.totalorder %s70, %s72
    %p79 = scmp.eq.s32.totalorder %s20, 1
    %p80 = por %p78, %p79
    %p81 = scmp.ne.s32.totalorder %s72, %s73
    %p82 = scmp.eq.s32.totalorder %s20, 0
    %p83 = por %p81, %p82
    %p84 = scmp.ne.s32.totalorder %s72, %s73
    %p85 = scmp.eq.s32.totalorder %s21, 1
    %p86 = por %p84, %p85
    %p88 = scmp.ne.s32.totalorder %s73, %s87
    %p89 = scmp.eq.s32.totalorder %s21, 0
    %p90 = por %p88, %p89
    %s92 = sadd.s32 %s91, 1
    %p95 = scmp.eq.s32.totalorder %s15, 1
    %p96 = scmp.ne.s32.totalorder %s91, %s93
    %p97 = scmp.eq.s32.totalorder %s15, 0
    %p98 = por %p96, %p97
    %p99 = scmp.ne.s32.totalorder %s91, %s93
    %p100 = scmp.eq.s32.totalorder %s20, 1
    %p101 = por %p99, %p100
    %p102 = scmp.ne.s32.totalorder %s93, %s94
    %p103 = scmp.eq.s32.totalorder %s20, 0
    %p104 = por %p102, %p103
    %p105 = scmp.ne.s32.totalorder %s93, %s94
    %p106 = scmp.eq.s32.totalorder %s21, 1
    %p107 = por %p105, %p106
    %p109 = scmp.ne.s32.totalorder %s94, %s108
    %p110 = scmp.eq.s32.totalorder %s21, 0
    %p111 = por %p109, %p110
    %s113 = sadd.s32 %s112, 1
    %p116 = scmp.eq.s32.totalorder %s15, 1
    %p117 = scmp.ne.s32.totalorder %s112, %s114
    %p118 = scmp.eq.s32.totalorder %s15, 0
    %p119 = por %p117, %p118
    %p120 = scmp.ne.s32.totalorder %s112, %s114
    %p121 = scmp.eq.s32.totalorder %s20, 1
    %p122 = por %p120, %p121
    %p123 = scmp.ne.s32.totalorder %s114, %s115
    %p124 = scmp.eq.s32.totalorder %s20, 0
    %p125 = por %p123, %p124
    %p126 = scmp.ne.s32.totalorder %s114, %s115
    %p127 = scmp.eq.s32.totalorder %s21, 1
    %p128 = por %p126, %p127
    %p130 = scmp.ne.s32.totalorder %s115, %s129
    %p131 = scmp.eq.s32.totalorder %s21, 0
    %p132 = por %p130, %p131
    %s134 = sadd.s32 %s133, 1
    %p137 = scmp.eq.s32.totalorder %s15, 1
    %p138 = scmp.ne.s32.totalorder %s133, %s135
    %p139 = scmp.eq.s32.totalorder %s15, 0
    %p140 = por %p138, %p139
    %p141 = scmp.ne.s32.totalorder %s133, %s135
    %p142 = scmp.eq.s32.totalorder %s20, 1
    %p143 = por %p141, %p142
    %p144 = scmp.ne.s32.totalorder %s135, %s136
    %p145 = scmp.eq.s32.totalorder %s20, 0
    %p146 = por %p144, %p145
    %p147 = scmp.ne.s32.totalorder %s135, %s136
    %p148 = scmp.eq.s32.totalorder %s21, 1
    %p149 = por %p147, %p148
    %p151 = scmp.ne.s32.totalorder %s136, %s150
    %p152 = scmp.eq.s32.totalorder %s21, 0
    %p153 = por %p151, %p152
    %s155 = sadd.s32 %s154, 1
    %p158 = scmp.eq.s32.totalorder %s15, 1
    %p159 = scmp.ne.s32.totalorder %s154, %s156
    %p160 = scmp.eq.s32.totalorder %s15, 0
    %p161 = por %p159, %p160
    %p162 = scmp.ne.s32.totalorder %s154, %s156
    %p163 = scmp.eq.s32.totalorder %s20, 1
    %p164 = por %p162, %p163
    %p165 = scmp.ne.s32.totalorder %s156, %s157
    %p166 = scmp.eq.s32.totalorder %s20, 0
    %p167 = por %p165, %p166
    %p168 = scmp.ne.s32.totalorder %s156, %s157
    %p169 = scmp.eq.s32.totalorder %s21, 1
    %p170 = por %p168, %p169
    %p172 = scmp.ne.s32.totalorder %s157, %s171
    %p173 = scmp.eq.s32.totalorder %s21, 0
    %p174 = por %p172, %p173
    %s175 = ssub.s32 %s15, %s22
    %p176 = scmp.eq.s32.totalorder %s175, 0
    %s178 = sadd.s32 %s177, 1
    %s179 = scalar_select %p176, %s177, %s178
    %p182 = pneg %p176
    %p183 = scmp.eq.s32.totalorder %s15, 1
    %p184 = por %p182, %p183
    %p185 = scmp.ne.s32.totalorder %s177, %s180
    %p186 = scmp.eq.s32.totalorder %s15, 0
    %p187 = por %p185, %p186
    %p188 = scmp.ne.s32.totalorder %s177, %s180
    %p189 = scmp.eq.s32.totalorder %s20, 1
    %p190 = por %p188, %p189
    %p191 = scmp.ne.s32.totalorder %s180, %s181
    %p192 = scmp.eq.s32.totalorder %s20, 0
    %p193 = por %p191, %p192
    %p194 = scmp.ne.s32.totalorder %s180, %s181
    %p195 = scmp.eq.s32.totalorder %s21, 1
    %p196 = por %p194, %p195
    %p198 = scmp.ne.s32.totalorder %s181, %s197
    %p199 = scmp.eq.s32.totalorder %s21, 0
    %p200 = por %p198, %p199
    %p201 = scmp.le.s32.totalorder 1, %s15
    %p202 = scmp.lt.s32.totalorder %s15, 3
    %p203 = pnand %p201, %p202
    %p204 = pneg %p203
    // Predicated region
    $region9: #{discriminator_forward.1} parent=5 // pred_check
      _
    $region10: #{discriminator_forward.1} parent=5 // pred_check_branch
      %206 = sbr.rel (%p203) target = $region12
    $region11: #{discriminator_forward.1} parent=5 // pred_region
      %s207 = ssub.s32 %s15, 1
      // Predicated region
      $region13: #{discriminator_forward.1} parent=11 // pred_check
        %p208 = pneg %p62
      $region14: #{discriminator_forward.1} parent=11 // pred_check_branch
        %210 = sbr.rel (%p208) target = $region16
      $region15: #{discriminator_forward.1} parent=11 // pred_region
        _
      $region16: #{discriminator_forward.1} parent=11 // pred_fallthru
        _
      // Predicated region
      $region17: #{discriminator_forward.1} parent=11 // pred_check
        %p211 = pneg %p83
      $region18: #{discriminator_forward.1} parent=11 // pred_check_branch
        %213 = sbr.rel (%p211) target = $region20
      $region19: #{discriminator_forward.1} parent=11 // pred_region
        _
      $region20: #{discriminator_forward.1} parent=11 // pred_fallthru
        _
      // Predicated region
      $region21: #{discriminator_forward.1} parent=11 // pred_check
        %p214 = pneg %p104
      $region22: #{discriminator_forward.1} parent=11 // pred_check_branch
        %216 = sbr.rel (%p214) target = $region24
      $region23: #{discriminator_forward.1} parent=11 // pred_region
        _
      $region24: #{discriminator_forward.1} parent=11 // pred_fallthru
        _
      // Predicated region
      $region25: #{discriminator_forward.1} parent=11 // pred_check
        %p217 = pneg %p125
      $region26: #{discriminator_forward.1} parent=11 // pred_check_branch
        %219 = sbr.rel (%p217) target = $region28
      $region27: #{discriminator_forward.1} parent=11 // pred_region
        _
      $region28: #{discriminator_forward.1} parent=11 // pred_fallthru
        _
      // Predicated region
      $region29: #{discriminator_forward.1} parent=11 // pred_check
        %p220 = pneg %p146
      $region30: #{discriminator_forward.1} parent=11 // pred_check_branch
        %222 = sbr.rel (%p220) target = $region32
      $region31: #{discriminator_forward.1} parent=11 // pred_region
        _
      $region32: #{discriminator_forward.1} parent=11 // pred_fallthru
        _
      // Predicated region
      $region33: #{discriminator_forward.1} parent=11 // pred_check
        %p223 = pneg %p167
      $region34: #{discriminator_forward.1} parent=11 // pred_check_branch
        %225 = sbr.rel (%p223) target = $region36
      $region35: #{discriminator_forward.1} parent=11 // pred_region
        _
      $region36: #{discriminator_forward.1} parent=11 // pred_fallthru
        _
    $region12: #{discriminator_forward.1} parent=5 // pred_fallthru
      _
    %p226 = scmp.lt.s32.totalorder %s15, 2
    // Predicated region
    $region37: #{discriminator_forward.1} parent=5 // pred_check
      %p227 = pneg %p226
    $region38: #{discriminator_forward.1} parent=5 // pred_check_branch
      %229 = sbr.rel (%p227) target = $region40
    $region39: #{discriminator_forward.1} parent=5 // pred_region
      // Predicated region
      $region41: #{discriminator_forward.1} parent=39 // pred_check
        %p230 = pneg %p35
      $region42: #{discriminator_forward.1} parent=39 // pred_check_branch
        %232 = sbr.rel (%p230) target = $region44
      $region43: #{discriminator_forward.1} parent=39 // pred_region
        %s233 = smul.u32 16, %s15
        %p234 = scmp.lt.s32.totalorder %s233, 31
        %s235 = scalar_select %p234, %s233, 31
        %s236 = smul.addr %s235, 8
        %s237 = scalar_lea.vmem %s0, %s236
        %s238 = smul.u32 16, %s15
      $region44: #{discriminator_forward.1} parent=39 // pred_fallthru
        _
    $region40: #{discriminator_forward.1} parent=5 // pred_fallthru
      _
    %p239 = scmp.le.s32.totalorder 1, %s15
    %p240 = scmp.lt.s32.totalorder %s15, 3
    %p241 = pnand %p239, %p240
    %p242 = pneg %p241
    // Predicated region
    $region45: #{discriminator_forward.1} parent=5 // pred_check
      _
    $region46: #{discriminator_forward.1} parent=5 // pred_check_branch
      %244 = sbr.rel (%p241) target = $region48
    $region47: #{discriminator_forward.1} parent=5 // pred_region
      %s245 = ssub.s32 %s15, 1
      %s246 = smul.u32 16, %s20
      %p247 = scmp.lt.s32.totalorder %s246, 31
      %s248 = scalar_select %p247, %s246, 31
      %s249 = smul.addr %s248, 8
      %s250 = scalar_lea.vmem %s0, %s249
      %p251 = pneg %p41
      %p252 = pneg %p38
      %p253 = pneg %p62
      %p254 = pneg %p59
      %p255 = pneg %p83
      %p256 = pneg %p80
      %p257 = pneg %p104
      %p258 = pneg %p101
      %p259 = pneg %p125
      %p260 = pneg %p122
      %p261 = pneg %p146
      %p262 = pneg %p143
      %p263 = pneg %p167
      %p264 = pneg %p164
      %p265 = pneg %p193
      %p266 = pneg %p190
      %s267 = smul.u32 16, %s20
      %p268 = scmp.lt.s32.totalorder %s267, 31
      %s269 = scalar_select %p268, %s267, 31
      %s270 = smul.addr %s269, 8
      %s271 = scalar_lea.vmem %s7, %s270
      %s272 = smul.u32 16, %s20
      %p273 = scmp.lt.s32.totalorder %s272, 31
      %s274 = scalar_select %p273, %s272, 31
      %s275 = smul.addr %s274, 8
      %s276 = scalar_lea.vmem %s0, %s275
      %s277 = smul.u32 16, %s20
      %s278 = smul.u32 16, %s20
      %p279 = scmp.lt.s32.totalorder %s278, 31
      %s280 = scalar_select %p279, %s278, 31
      %s281 = smul.addr %s280, 8
      %s282 = scalar_lea.vmem %s7, %s281
      %s283 = smul.u32 16, %s20
      %v284 = vld [vmem:[%s276] sm:$0xff]
      %v285 = vld [vmem:[%s276 + $0x8] sm:$0xff]
      %v286 = vld [vmem:[%s276 + $0x10] sm:$0xff]
      %v287 = vld [vmem:[%s276 + $0x18] sm:$0xff]
      %v288 = vld [vmem:[%s276 + $0x20] sm:$0xff]
      %v289 = vld [vmem:[%s276 + $0x28] sm:$0xff]
      %v290 = vld [vmem:[%s276 + $0x30] sm:$0xff]
      %v291 = vld [vmem:[%s276 + $0x38] sm:$0xff]
      %v292 = vld [vmem:[%s276 + $0x40] sm:$0xff]
      %v293 = vld [vmem:[%s276 + $0x48] sm:$0xff]
      %v294 = vld [vmem:[%s276 + $0x50] sm:$0xff]
      %v295 = vld [vmem:[%s276 + $0x58] sm:$0xff]
      %v296 = vld [vmem:[%s276 + $0x60] sm:$0xff]
      %v297 = vld [vmem:[%s276 + $0x68] sm:$0xff]
      %v298 = vld [vmem:[%s276 + $0x70] sm:$0xff]
      %v299 = vld [vmem:[%s276 + $0x78] sm:$0xff]
      %v300 = vld [vmem:[%s1] sm:$0xff]
      %v301 = vld [vmem:[%s1 + $0x8] sm:$0xff]
      %v302 = vld [vmem:[%s2] sm:$0x1]
      %v304 = vlaneseq
      %v305 = vshrl.u32 %v304, 7
      %v306 = vsub.s32 0, %v305
      %v307 = vrot.slane %v302, %v306
      %vm309 = vcmask 130048
      %v311 = vsel %vm309, %v284, 0
      %v314 = vsel %vm309, %v285, 0
      %v317 = vsel %vm309, %v286, 0
      %v320 = vsel %vm309, %v287, 0
      %v323 = vsel %vm309, %v288, 0
      %v326 = vsel %vm309, %v289, 0
      %v329 = vsel %vm309, %v290, 0
      %v332 = vsel %vm309, %v291, 0
      %v335 = vsel %vm309, %v292, 0
      %v338 = vsel %vm309, %v293, 0
      %v341 = vsel %vm309, %v294, 0
      %v344 = vsel %vm309, %v295, 0
      %v347 = vsel %vm309, %v296, 0
      %v350 = vsel %vm309, %v297, 0
      %v353 = vsel %vm309, %v298, 0
      %v356 = vsel %vm309, %v299, 0
      %358 = vmatprep.subr.mxu0 0.0
      %359 = vmatpush1.msra.mxu0 %v300
      %360 = vmatprep.subr.mxu0 0.0
      %361 = vmatpush1.msra.mxu0 %v301
      %362 = vmatprep.subr.mxu0 0.0
      %363 = vmatpush1.msra.mxu0 0.0
      %364 = vmatprep.subr.mxu0 0.0
      %365 = vmatpush1.msra.mxu0 0.0
      %366 = vmatprep.subr.mxu0 0.0
      %367 = vmatpush1.msra.mxu0 0.0
      %368 = vmatprep.subr.mxu0 0.0
      %369 = vmatpush1.msra.mxu0 0.0
      %370 = vmatprep.subr.mxu0 0.0
      %371 = vmatpush1.msra.mxu0 0.0
      %372 = vmatprep.subr.mxu0 0.0
      %373 = vmatpush1.msra.mxu0 0.0
      %374 = vmatprep.subr.mxu0 0.0
      %375 = vmatpush1.msra.mxu0 0.0
      %376 = vmatprep.subr.mxu0 0.0
      %377 = vmatpush1.msra.mxu0 0.0
      %378 = vmatprep.subr.mxu0 0.0
      %379 = vmatpush1.msra.mxu0 0.0
      %380 = vmatprep.subr.mxu0 0.0
      %381 = vmatpush1.msra.mxu0 0.0
      %382 = vmatprep.subr.mxu0 0.0
      %383 = vmatpush1.msra.mxu0 0.0
      %384 = vmatprep.subr.mxu0 0.0
      %385 = vmatpush1.msra.mxu0 0.0
      %386 = vmatprep.subr.mxu0 0.0
      %387 = vmatpush1.msra.mxu0 0.0
      %388 = vmatprep.subr.mxu0 0.0
      %389 = vmatpush1.msra.mxu0 0.0
      %390 = vmatprep.subr.mxu0 0.0
      %391 = vmatpush1.msra.mxu0 0.0
      %392 = vmatprep.subr.mxu0 0.0
      %393 = vmatpush1.msra.mxu0 0.0
      %394 = vmatprep.subr.mxu0 0.0
      %395 = vmatpush1.msra.mxu0 0.0
      %396 = vmatprep.subr.mxu0 0.0
      %397 = vmatpush1.msra.mxu0 0.0
      %398 = vmatprep.subr.mxu0 0.0
      %399 = vmatpush1.msra.mxu0 0.0
      %400 = vmatprep.subr.mxu0 0.0
      %401 = vmatpush1.msra.mxu0 0.0
      %402 = vmatprep.subr.mxu0 0.0
      %403 = vmatpush1.msra.mxu0 0.0
      %404 = vmatprep.subr.mxu0 0.0
      %405 = vmatpush1.msra.mxu0 0.0
      %406 = vmatprep.subr.mxu0 0.0
      %407 = vmatpush1.msra.mxu0 0.0
      %408 = vmatprep.subr.mxu0 0.0
      %409 = vmatpush1.msra.mxu0 0.0
      %410 = vmatprep.subr.mxu0 0.0
      %411 = vmatpush1.msra.mxu0 0.0
      %412 = vmatprep.subr.mxu0 0.0
      %413 = vmatpush1.msra.mxu0 0.0
      %414 = vmatprep.subr.mxu0 0.0
      %415 = vmatpush1.msra.mxu0 0.0
      %416 = vmatprep.subr.mxu0 0.0
      %417 = vmatpush1.msra.mxu0 0.0
      %418 = vmatprep.subr.mxu0 0.0
      %419 = vmatpush1.msra.mxu0 0.0
      %420 = vmatprep.subr.mxu0 0.0
      %421 = vmatpush1.msra.mxu0 0.0
      %422 = vmatprep.mubr.f32.mxu0 0.0
      %423 = vmatmul.mubr.f32.gmra.mrb[0].mxu0 %v311
      %v424 = vpop.f32.mrb[0].mxu0
      %v425 = vadd.f32 %v307, %v424
      %v426 = vpop.f32.mrb[0].mxu0
      %427 = vmatprep.mubr.f32.mxu0 0.0
      %428 = vmatmul.mubr.f32.gmra.mrb[0].mxu0 %v314
      %v429 = vpop.f32.mrb[0].mxu0
      %v430 = vadd.f32 %v307, %v429
      %v431 = vpop.f32.mrb[0].mxu0
      %432 = vmatprep.mubr.f32.mxu0 0.0
      %433 = vmatmul.mubr.f32.gmra.mrb[0].mxu0 %v317
      %v434 = vpop.f32.mrb[0].mxu0
      %v435 = vadd.f32 %v307, %v434
      %v436 = vpop.f32.mrb[0].mxu0
      %437 = vmatprep.mubr.f32.mxu0 0.0
      %438 = vmatmul.mubr.f32.gmra.mrb[0].mxu0 %v320
      %v439 = vpop.f32.mrb[0].mxu0
      %v440 = vadd.f32 %v307, %v439
      %v441 = vpop.f32.mrb[0].mxu0
      %442 = vmatprep.mubr.f32.mxu0 0.0
      %443 = vmatmul.mubr.f32.gmra.mrb[0].mxu0 %v323
      %v444 = vpop.f32.mrb[0].mxu0
      %v445 = vadd.f32 %v307, %v444
      %v446 = vpop.f32.mrb[0].mxu0
      %447 = vmatprep.mubr.f32.mxu0 0.0
      %448 = vmatmul.mubr.f32.gmra.mrb[0].mxu0 %v326
      %v449 = vpop.f32.mrb[0].mxu0
      %v450 = vadd.f32 %v307, %v449
      %v451 = vpop.f32.mrb[0].mxu0
      %452 = vmatprep.mubr.f32.mxu0 0.0
      %453 = vmatmul.mubr.f32.gmra.mrb[0].mxu0 %v329
      %v454 = vpop.f32.mrb[0].mxu0
      %v455 = vadd.f32 %v307, %v454
      %v456 = vpop.f32.mrb[0].mxu0
      %457 = vmatprep.mubr.f32.mxu0 0.0
      %458 = vmatmul.mubr.f32.gmra.mrb[0].mxu0 %v332
      %v459 = vpop.f32.mrb[0].mxu0
      %v460 = vadd.f32 %v307, %v459
      %v461 = vpop.f32.mrb[0].mxu0
      %462 = vmatprep.mubr.f32.mxu0 0.0
      %463 = vmatmul.mubr.f32.gmra.mrb[0].mxu0 %v335
      %v464 = vpop.f32.mrb[0].mxu0
      %v465 = vadd.f32 %v307, %v464
      %v466 = vpop.f32.mrb[0].mxu0
      %467 = vmatprep.mubr.f32.mxu0 0.0
      %468 = vmatmul.mubr.f32.gmra.mrb[0].mxu0 %v338
      %v469 = vpop.f32.mrb[0].mxu0
      %v470 = vadd.f32 %v307, %v469
      %v471 = vpop.f32.mrb[0].mxu0
      %472 = vmatprep.mubr.f32.mxu0 0.0
      %473 = vmatmul.mubr.f32.gmra.mrb[0].mxu0 %v341
      %v474 = vpop.f32.mrb[0].mxu0
      %v475 = vadd.f32 %v307, %v474
      %v476 = vpop.f32.mrb[0].mxu0
      %477 = vmatprep.mubr.f32.mxu0 0.0
      %478 = vmatmul.mubr.f32.gmra.mrb[0].mxu0 %v344
      %v479 = vpop.f32.mrb[0].mxu0
      %v480 = vadd.f32 %v307, %v479
      %v481 = vpop.f32.mrb[0].mxu0
      %482 = vmatprep.mubr.f32.mxu0 0.0
      %483 = vmatmul.mubr.f32.gmra.mrb[0].mxu0 %v347
      %v484 = vpop.f32.mrb[0].mxu0
      %v485 = vadd.f32 %v307, %v484
      %v486 = vpop.f32.mrb[0].mxu0
      %487 = vmatprep.mubr.f32.mxu0 0.0
      %488 = vmatmul.mubr.f32.gmra.mrb[0].mxu0 %v350
      %v489 = vpop.f32.mrb[0].mxu0
      %v490 = vadd.f32 %v307, %v489
      %v491 = vpop.f32.mrb[0].mxu0
      %492 = vmatprep.mubr.f32.mxu0 0.0
      %493 = vmatmul.mubr.f32.gmra.mrb[0].mxu0 %v353
      %v494 = vpop.f32.mrb[0].mxu0
      %v495 = vadd.f32 %v307, %v494
      %v496 = vpop.f32.mrb[0].mxu0
      %497 = vmatprep.mubr.f32.mxu0 0.0
      %498 = vmatmul.mubr.f32.gmra.mrb[0].mxu0 %v356
      %v499 = vpop.f32.mrb[0].mxu0
      %v500 = vadd.f32 %v307, %v499
      %v501 = vpop.f32.mrb[0].mxu0
      %502 = vdwg.mxu0
      %v503 = vxor.u32 %v425, 2147483648
      %v504 = vxor.u32 %v430, 2147483648
      %v505 = vxor.u32 %v435, 2147483648
      %v506 = vxor.u32 %v440, 2147483648
      %v507 = vxor.u32 %v445, 2147483648
      %v508 = vxor.u32 %v450, 2147483648
      %v509 = vxor.u32 %v455, 2147483648
      %v510 = vxor.u32 %v460, 2147483648
      %v511 = vxor.u32 %v465, 2147483648
      %v512 = vxor.u32 %v470, 2147483648
      %v513 = vxor.u32 %v475, 2147483648
      %v514 = vxor.u32 %v480, 2147483648
      %v515 = vxor.u32 %v485, 2147483648
      %v516 = vxor.u32 %v490, 2147483648
      %v517 = vxor.u32 %v495, 2147483648
      %v518 = vxor.u32 %v500, 2147483648
      %v519 = vmul.f32 %v503, 1.442695
      %v520 = vpow.pop %v519
      %v521 = vmul.f32 %v504, 1.442695
      %v522 = vpow.pop %v521
      %v523 = vmul.f32 %v505, 1.442695
      %v524 = vpow.pop %v523
      %v525 = vmul.f32 %v506, 1.442695
      %v526 = vpow.pop %v525
      %v527 = vmul.f32 %v507, 1.442695
      %v528 = vpow.pop %v527
      %v529 = vmul.f32 %v508, 1.442695
      %v530 = vpow.pop %v529
      %v531 = vmul.f32 %v509, 1.442695
      %v532 = vpow.pop %v531
      %v533 = vmul.f32 %v510, 1.442695
      %v534 = vpow.pop %v533
      %v535 = vmul.f32 %v511, 1.442695
      %v536 = vpow.pop %v535
      %v537 = vmul.f32 %v512, 1.442695
      %v538 = vpow.pop %v537
      %v539 = vmul.f32 %v513, 1.442695
      %v540 = vpow.pop %v539
      %v541 = vmul.f32 %v514, 1.442695
      %v542 = vpow.pop %v541
      %v543 = vmul.f32 %v515, 1.442695
      %v544 = vpow.pop %v543
      %v545 = vmul.f32 %v516, 1.442695
      %v546 = vpow.pop %v545
      %v547 = vmul.f32 %v517, 1.442695
      %v548 = vpow.pop %v547
      %v549 = vmul.f32 %v518, 1.442695
      %v550 = vpow.pop %v549
      %v551 = vadd.f32 %v520, 1.0
      %v552 = vadd.f32 %v522, 1.0
      %v553 = vadd.f32 %v524, 1.0
      %v554 = vadd.f32 %v526, 1.0
      %v555 = vadd.f32 %v528, 1.0
      %v556 = vadd.f32 %v530, 1.0
      %v557 = vadd.f32 %v532, 1.0
      %v558 = vadd.f32 %v534, 1.0
      %v559 = vadd.f32 %v536, 1.0
      %v560 = vadd.f32 %v538, 1.0
      %v561 = vadd.f32 %v540, 1.0
      %v562 = vadd.f32 %v542, 1.0
      %v563 = vadd.f32 %v544, 1.0
      %v564 = vadd.f32 %v546, 1.0
      %v565 = vadd.f32 %v548, 1.0
      %v566 = vadd.f32 %v550, 1.0
      %v567 = vrcp.pop %v551
      %v568 = vmul.f32 1.0, %v567
      %v569 = vrcp.pop %v552
      %v570 = vmul.f32 1.0, %v569
      %v571 = vrcp.pop %v553
      %v572 = vmul.f32 1.0, %v571
      %v573 = vrcp.pop %v554
      %v574 = vmul.f32 1.0, %v573
      %v575 = vrcp.pop %v555
      %v576 = vmul.f32 1.0, %v575
      %v577 = vrcp.pop %v556
      %v578 = vmul.f32 1.0, %v577
      %v579 = vrcp.pop %v557
      %v580 = vmul.f32 1.0, %v579
      %v581 = vrcp.pop %v558
      %v582 = vmul.f32 1.0, %v581
      %v583 = vrcp.pop %v559
      %v584 = vmul.f32 1.0, %v583
      %v585 = vrcp.pop %v560
      %v586 = vmul.f32 1.0, %v585
      %v587 = vrcp.pop %v561
      %v588 = vmul.f32 1.0, %v587
      %v589 = vrcp.pop %v562
      %v590 = vmul.f32 1.0, %v589
      %v591 = vrcp.pop %v563
      %v592 = vmul.f32 1.0, %v591
      %v593 = vrcp.pop %v564
      %v594 = vmul.f32 1.0, %v593
      %v595 = vrcp.pop %v565
      %v596 = vmul.f32 1.0, %v595
      %v597 = vrcp.pop %v566
      %v598 = vmul.f32 1.0, %v597
      %v599 = vld [vmem:[%s3] sm:$0xff]
      %v600 = vld [vmem:[%s3 + $0x8] sm:$0xff]
      %v601 = vld [vmem:[%s3 + $0x10] sm:$0xff]
      %v602 = vld [vmem:[%s3 + $0x18] sm:$0xff]
      %v603 = vld [vmem:[%s4] sm:$0x1]
      %v605 = vlaneseq
      %v606 = vshrl.u32 %v605, 7
      %v607 = vsub.s32 0, %v606
      %v608 = vrot.slane %v603, %v607
      %vm610 = vcmask 261120
      %v612 = vsel %vm610, %v568, 0
      %v615 = vsel %vm610, %v570, 0
      %v618 = vsel %vm610, %v572, 0
      %v621 = vsel %vm610, %v574, 0
      %v624 = vsel %vm610, %v576, 0
      %v627 = vsel %vm610, %v578, 0
      %v630 = vsel %vm610, %v580, 0
      %v633 = vsel %vm610, %v582, 0
      %v636 = vsel %vm610, %v584, 0
      %v639 = vsel %vm610, %v586, 0
      %v642 = vsel %vm610, %v588, 0
      %v645 = vsel %vm610, %v590, 0
      %v648 = vsel %vm610, %v592, 0
      %v651 = vsel %vm610, %v594, 0
      %v654 = vsel %vm610, %v596, 0
      %v657 = vsel %vm610, %v598, 0
      %659 = vmatprep.subr.mxu0 0.0
      %660 = vmatpush1.msra.mxu0 %v599
      %661 = vmatprep.subr.mxu0 0.0
      %662 = vmatpush1.msra.mxu0 %v600
      %663 = vmatprep.subr.mxu0 0.0
      %664 = vmatpush1.msra.mxu0 %v601
      %665 = vmatprep.subr.mxu0 0.0
      %666 = vmatpush1.msra.mxu0 %v602
      %667 = vmatprep.subr.mxu0 0.0
      %668 = vmatpush1.msra.mxu0 0.0
      %669 = vmatprep.subr.mxu0 0.0
      %670 = vmatpush1.msra.mxu0 0.0
      %671 = vmatprep.subr.mxu0 0.0
      %672 = vmatpush1.msra.mxu0 0.0
      %673 = vmatprep.subr.mxu0 0.0
      %674 = vmatpush1.msra.mxu0 0.0
      %675 = vmatprep.subr.mxu0 0.0
      %676 = vmatpush1.msra.mxu0 0.0
      %677 = vmatprep.subr.mxu0 0.0
      %678 = vmatpush1.msra.mxu0 0.0
      %679 = vmatprep.subr.mxu0 0.0
      %680 = vmatpush1.msra.mxu0 0.0
      %681 = vmatprep.subr.mxu0 0.0
      %682 = vmatpush1.msra.mxu0 0.0
      %683 = vmatprep.subr.mxu0 0.0
      %684 = vmatpush1.msra.mxu0 0.0
      %685 = vmatprep.subr.mxu0 0.0
      %686 = vmatpush1.msra.mxu0 0.0
      %687 = vmatprep.subr.mxu0 0.0
      %688 = vmatpush1.msra.mxu0 0.0
      %689 = vmatprep.subr.mxu0 0.0
      %690 = vmatpush1.msra.mxu0 0.0
      %691 = vmatprep.subr.mxu0 0.0
      %692 = vmatpush1.msra.mxu0 0.0
      %693 = vmatprep.subr.mxu0 0.0
      %694 = vmatpush1.msra.mxu0 0.0
      %695 = vmatprep.subr.mxu0 0.0
      %696 = vmatpush1.msra.mxu0 0.0
      %697 = vmatprep.subr.mxu0 0.0
      %698 = vmatpush1.msra.mxu0 0.0
      %699 = vmatprep.subr.mxu0 0.0
      %700 = vmatpush1.msra.mxu0 0.0
      %701 = vmatprep.subr.mxu0 0.0
      %702 = vmatpush1.msra.mxu0 0.0
      %703 = vmatprep.subr.mxu0 0.0
      %704 = vmatpush1.msra.mxu0 0.0
      %705 = vmatprep.subr.mxu0 0.0
      %706 = vmatpush1.msra.mxu0 0.0
      %707 = vmatprep.subr.mxu0 0.0
      %708 = vmatpush1.msra.mxu0 0.0
      %709 = vmatprep.subr.mxu0 0.0
      %710 = vmatpush1.msra.mxu0 0.0
      %711 = vmatprep.subr.mxu0 0.0
      %712 = vmatpush1.msra.mxu0 0.0
      %713 = vmatprep.subr.mxu0 0.0
      %714 = vmatpush1.msra.mxu0 0.0
      %715 = vmatprep.subr.mxu0 0.0
      %716 = vmatpush1.msra.mxu0 0.0
      %717 = vmatprep.subr.mxu0 0.0
      %718 = vmatpush1.msra.mxu0 0.0
      %719 = vmatprep.subr.mxu0 0.0
      %720 = vmatpush1.msra.mxu0 0.0
      %721 = vmatprep.subr.mxu0 0.0
      %722 = vmatpush1.msra.mxu0 0.0
      %723 = vmatprep.mubr.f32.mxu0 0.0
      %724 = vmatmul.mubr.f32.gmra.mrb[0].mxu0 %v612
      %v725 = vpop.f32.mrb[0].mxu0
      %v726 = vadd.f32 %v608, %v725
      %v727 = vpop.f32.mrb[0].mxu0
      %728 = vmatprep.mubr.f32.mxu0 0.0
      %729 = vmatmul.mubr.f32.gmra.mrb[0].mxu0 %v615
      %v730 = vpop.f32.mrb[0].mxu0
      %v731 = vadd.f32 %v608, %v730
      %v732 = vpop.f32.mrb[0].mxu0
      %733 = vmatprep.mubr.f32.mxu0 0.0
      %734 = vmatmul.mubr.f32.gmra.mrb[0].mxu0 %v618
      %v735 = vpop.f32.mrb[0].mxu0
      %v736 = vadd.f32 %v608, %v735
      %v737 = vpop.f32.mrb[0].mxu0
      %738 = vmatprep.mubr.f32.mxu0 0.0
      %739 = vmatmul.mubr.f32.gmra.mrb[0].mxu0 %v621
      %v740 = vpop.f32.mrb[0].mxu0
      %v741 = vadd.f32 %v608, %v740
      %v742 = vpop.f32.mrb[0].mxu0
      %743 = vmatprep.mubr.f32.mxu0 0.0
      %744 = vmatmul.mubr.f32.gmra.mrb[0].mxu0 %v624
      %v745 = vpop.f32.mrb[0].mxu0
      %v746 = vadd.f32 %v608, %v745
      %v747 = vpop.f32.mrb[0].mxu0
      %748 = vmatprep.mubr.f32.mxu0 0.0
      %749 = vmatmul.mubr.f32.gmra.mrb[0].mxu0 %v627
      %v750 = vpop.f32.mrb[0].mxu0
      %v751 = vadd.f32 %v608, %v750
      %v752 = vpop.f32.mrb[0].mxu0
      %753 = vmatprep.mubr.f32.mxu0 0.0
      %754 = vmatmul.mubr.f32.gmra.mrb[0].mxu0 %v630
      %v755 = vpop.f32.mrb[0].mxu0
      %v756 = vadd.f32 %v608, %v755
      %v757 = vpop.f32.mrb[0].mxu0
      %758 = vmatprep.mubr.f32.mxu0 0.0
      %759 = vmatmul.mubr.f32.gmra.mrb[0].mxu0 %v633
      %v760 = vpop.f32.mrb[0].mxu0
      %v761 = vadd.f32 %v608, %v760
      %v762 = vpop.f32.mrb[0].mxu0
      %763 = vmatprep.mubr.f32.mxu0 0.0
      %764 = vmatmul.mubr.f32.gmra.mrb[0].mxu0 %v636
      %v765 = vpop.f32.mrb[0].mxu0
      %v766 = vadd.f32 %v608, %v765
      %v767 = vpop.f32.mrb[0].mxu0
      %768 = vmatprep.mubr.f32.mxu0 0.0
      %769 = vmatmul.mubr.f32.gmra.mrb[0].mxu0 %v639
      %v770 = vpop.f32.mrb[0].mxu0
      %v771 = vadd.f32 %v608, %v770
      %v772 = vpop.f32.mrb[0].mxu0
      %773 = vmatprep.mubr.f32.mxu0 0.0
      %774 = vmatmul.mubr.f32.gmra.mrb[0].mxu0 %v642
      %v775 = vpop.f32.mrb[0].mxu0
      %v776 = vadd.f32 %v608, %v775
      %v777 = vpop.f32.mrb[0].mxu0
      %778 = vmatprep.mubr.f32.mxu0 0.0
      %779 = vmatmul.mubr.f32.gmra.mrb[0].mxu0 %v645
      %v780 = vpop.f32.mrb[0].mxu0
      %v781 = vadd.f32 %v608, %v780
      %v782 = vpop.f32.mrb[0].mxu0
      %783 = vmatprep.mubr.f32.mxu0 0.0
      %784 = vmatmul.mubr.f32.gmra.mrb[0].mxu0 %v648
      %v785 = vpop.f32.mrb[0].mxu0
      %v786 = vadd.f32 %v608, %v785
      %v787 = vpop.f32.mrb[0].mxu0
      %788 = vmatprep.mubr.f32.mxu0 0.0
      %789 = vmatmul.mubr.f32.gmra.mrb[0].mxu0 %v651
      %v790 = vpop.f32.mrb[0].mxu0
      %v791 = vadd.f32 %v608, %v790
      %v792 = vpop.f32.mrb[0].mxu0
      %793 = vmatprep.mubr.f32.mxu0 0.0
      %794 = vmatmul.mubr.f32.gmra.mrb[0].mxu0 %v654
      %v795 = vpop.f32.mrb[0].mxu0
      %v796 = vadd.f32 %v608, %v795
      %v797 = vpop.f32.mrb[0].mxu0
      %798 = vmatprep.mubr.f32.mxu0 0.0
      %799 = vmatmul.mubr.f32.gmra.mrb[0].mxu0 %v657
      %v800 = vpop.f32.mrb[0].mxu0
      %v801 = vadd.f32 %v608, %v800
      %v802 = vpop.f32.mrb[0].mxu0
      %803 = vdwg.mxu0
      %v804 = vxor.u32 %v726, 2147483648
      %v805 = vxor.u32 %v731, 2147483648
      %v806 = vxor.u32 %v736, 2147483648
      %v807 = vxor.u32 %v741, 2147483648
      %v808 = vxor.u32 %v746, 2147483648
      %v809 = vxor.u32 %v751, 2147483648
      %v810 = vxor.u32 %v756, 2147483648
      %v811 = vxor.u32 %v761, 2147483648
      %v812 = vxor.u32 %v766, 2147483648
      %v813 = vxor.u32 %v771, 2147483648
      %v814 = vxor.u32 %v776, 2147483648
      %v815 = vxor.u32 %v781, 2147483648
      %v816 = vxor.u32 %v786, 2147483648
      %v817 = vxor.u32 %v791, 2147483648
      %v818 = vxor.u32 %v796, 2147483648
      %v819 = vxor.u32 %v801, 2147483648
      %v820 = vmul.f32 %v804, 1.442695
      %v821 = vpow.pop %v820
      %v822 = vmul.f32 %v805, 1.442695
      %v823 = vpow.pop %v822
      %v824 = vmul.f32 %v806, 1.442695
      %v825 = vpow.pop %v824
      %v826 = vmul.f32 %v807, 1.442695
      %v827 = vpow.pop %v826
      %v828 = vmul.f32 %v808, 1.442695
      %v829 = vpow.pop %v828
      %v830 = vmul.f32 %v809, 1.442695
      %v831 = vpow.pop %v830
      %v832 = vmul.f32 %v810, 1.442695
      %v833 = vpow.pop %v832
      %v834 = vmul.f32 %v811, 1.442695
      %v835 = vpow.pop %v834
      %v836 = vmul.f32 %v812, 1.442695
      %v837 = vpow.pop %v836
      %v838 = vmul.f32 %v813, 1.442695
      %v839 = vpow.pop %v838
      %v840 = vmul.f32 %v814, 1.442695
      %v841 = vpow.pop %v840
      %v842 = vmul.f32 %v815, 1.442695
      %v843 = vpow.pop %v842
      %v844 = vmul.f32 %v816, 1.442695
      %v845 = vpow.pop %v844
      %v846 = vmul.f32 %v817, 1.442695
      %v847 = vpow.pop %v846
      %v848 = vmul.f32 %v818, 1.442695
      %v849 = vpow.pop %v848
      %v850 = vmul.f32 %v819, 1.442695
      %v851 = vpow.pop %v850
      %v852 = vadd.f32 %v821, 1.0
      %v853 = vadd.f32 %v823, 1.0
      %v854 = vadd.f32 %v825, 1.0
      %v855 = vadd.f32 %v827, 1.0
      %v856 = vadd.f32 %v829, 1.0
      %v857 = vadd.f32 %v831, 1.0
      %v858 = vadd.f32 %v833, 1.0
      %v859 = vadd.f32 %v835, 1.0
      %v860 = vadd.f32 %v837, 1.0
      %v861 = vadd.f32 %v839, 1.0
      %v862 = vadd.f32 %v841, 1.0
      %v863 = vadd.f32 %v843, 1.0
      %v864 = vadd.f32 %v845, 1.0
      %v865 = vadd.f32 %v847, 1.0
      %v866 = vadd.f32 %v849, 1.0
      %v867 = vadd.f32 %v851, 1.0
      %v868 = vrcp.pop %v852
      %v869 = vmul.f32 1.0, %v868
      %v870 = vrcp.pop %v853
      %v871 = vmul.f32 1.0, %v870
      %v872 = vrcp.pop %v854
      %v873 = vmul.f32 1.0, %v872
      %v874 = vrcp.pop %v855
      %v875 = vmul.f32 1.0, %v874
      %v876 = vrcp.pop %v856
      %v877 = vmul.f32 1.0, %v876
      %v878 = vrcp.pop %v857
      %v879 = vmul.f32 1.0, %v878
      %v880 = vrcp.pop %v858
      %v881 = vmul.f32 1.0, %v880
      %v882 = vrcp.pop %v859
      %v883 = vmul.f32 1.0, %v882
      %v884 = vrcp.pop %v860
      %v885 = vmul.f32 1.0, %v884
      %v886 = vrcp.pop %v861
      %v887 = vmul.f32 1.0, %v886
      %v888 = vrcp.pop %v862
      %v889 = vmul.f32 1.0, %v888
      %v890 = vrcp.pop %v863
      %v891 = vmul.f32 1.0, %v890
      %v892 = vrcp.pop %v864
      %v893 = vmul.f32 1.0, %v892
      %v894 = vrcp.pop %v865
      %v895 = vmul.f32 1.0, %v894
      %v896 = vrcp.pop %v866
      %v897 = vmul.f32 1.0, %v896
      %v898 = vrcp.pop %v867
      %v899 = vmul.f32 1.0, %v898
      %v900 = vld [vmem:[%s5] sm:$0xff]
      %v901 = vld [vmem:[%s5 + $0x8] sm:$0xff]
      %v902 = vld [vmem:[%s5 + $0x10] sm:$0xff]
      %v903 = vld [vmem:[%s5 + $0x18] sm:$0xff]
      %v904 = vld [vmem:[#allocation2] sm:$0x1]
      %v906 = vlaneseq
      %v907 = vshrl.u32 %v906, 7
      %v908 = vsub.s32 0, %v907
      %v909 = vrot.slane %v904, %v908
      %v912 = vsel %vm610, %v869, 0
      %v915 = vsel %vm610, %v871, 0
      %v918 = vsel %vm610, %v873, 0
      %v921 = vsel %vm610, %v875, 0
      %v924 = vsel %vm610, %v877, 0
      %v927 = vsel %vm610, %v879, 0
      %v930 = vsel %vm610, %v881, 0
      %v933 = vsel %vm610, %v883, 0
      %v936 = vsel %vm610, %v885, 0
      %v939 = vsel %vm610, %v887, 0
      %v942 = vsel %vm610, %v889, 0
      %v945 = vsel %vm610, %v891, 0
      %v948 = vsel %vm610, %v893, 0
      %v951 = vsel %vm610, %v895, 0
      %v954 = vsel %vm610, %v897, 0
      %v957 = vsel %vm610, %v899, 0
      %959 = vmatprep.subr.mxu0 0.0
      %960 = vmatpush1.msra.mxu0 %v900
      %961 = vmatprep.subr.mxu0 0.0
      %962 = vmatpush1.msra.mxu0 %v901
      %963 = vmatprep.subr.mxu0 0.0
      %964 = vmatpush1.msra.mxu0 %v902
      %965 = vmatprep.subr.mxu0 0.0
      %966 = vmatpush1.msra.mxu0 %v903
      %967 = vmatprep.subr.mxu0 0.0
      %968 = vmatpush1.msra.mxu0 0.0
      %969 = vmatprep.subr.mxu0 0.0
      %970 = vmatpush1.msra.mxu0 0.0
      %971 = vmatprep.subr.mxu0 0.0
      %972 = vmatpush1.msra.mxu0 0.0
      %973 = vmatprep.subr.mxu0 0.0
      %974 = vmatpush1.msra.mxu0 0.0
      %975 = vmatprep.subr.mxu0 0.0
      %976 = vmatpush1.msra.mxu0 0.0
      %977 = vmatprep.subr.mxu0 0.0
      %978 = vmatpush1.msra.mxu0 0.0
      %979 = vmatprep.subr.mxu0 0.0
      %980 = vmatpush1.msra.mxu0 0.0
      %981 = vmatprep.subr.mxu0 0.0
      %982 = vmatpush1.msra.mxu0 0.0
      %983 = vmatprep.subr.mxu0 0.0
      %984 = vmatpush1.msra.mxu0 0.0
      %985 = vmatprep.subr.mxu0 0.0
      %986 = vmatpush1.msra.mxu0 0.0
      %987 = vmatprep.subr.mxu0 0.0
      %988 = vmatpush1.msra.mxu0 0.0
      %989 = vmatprep.subr.mxu0 0.0
      %990 = vmatpush1.msra.mxu0 0.0
      %991 = vmatprep.subr.mxu0 0.0
      %992 = vmatpush1.msra.mxu0 0.0
      %993 = vmatprep.subr.mxu0 0.0
      %994 = vmatpush1.msra.mxu0 0.0
      %995 = vmatprep.subr.mxu0 0.0
      %996 = vmatpush1.msra.mxu0 0.0
      %997 = vmatprep.subr.mxu0 0.0
      %998 = vmatpush1.msra.mxu0 0.0
      %999 = vmatprep.subr.mxu0 0.0
      %1000 = vmatpush1.msra.mxu0 0.0
      %1001 = vmatprep.subr.mxu0 0.0
      %1002 = vmatpush1.msra.mxu0 0.0
      %1003 = vmatprep.subr.mxu0 0.0
      %1004 = vmatpush1.msra.mxu0 0.0
      %1005 = vmatprep.subr.mxu0 0.0
      %1006 = vmatpush1.msra.mxu0 0.0
      %1007 = vmatprep.subr.mxu0 0.0
      %1008 = vmatpush1.msra.mxu0 0.0
      %1009 = vmatprep.subr.mxu0 0.0
      %1010 = vmatpush1.msra.mxu0 0.0
      %1011 = vmatprep.subr.mxu0 0.0
      %1012 = vmatpush1.msra.mxu0 0.0
      %1013 = vmatprep.subr.mxu0 0.0
      %1014 = vmatpush1.msra.mxu0 0.0
      %1015 = vmatprep.subr.mxu0 0.0
      %1016 = vmatpush1.msra.mxu0 0.0
      %1017 = vmatprep.subr.mxu0 0.0
      %1018 = vmatpush1.msra.mxu0 0.0
      %1019 = vmatprep.subr.mxu0 0.0
      %1020 = vmatpush1.msra.mxu0 0.0
      %1021 = vmatprep.subr.mxu0 0.0
      %1022 = vmatpush1.msra.mxu0 0.0
      %1023 = vmatprep.mubr.f32.mxu0 0.0
      %1024 = vmatmul.mubr.f32.gmra.mrb[0].mxu0 %v912
      %v1025 = vpop.f32.mrb[0].mxu0
      %v1026 = vadd.f32 %v909, %v1025
      %v1027 = vpop.f32.mrb[0].mxu0
      %1028 = vmatprep.mubr.f32.mxu0 0.0
      %1029 = vmatmul.mubr.f32.gmra.mrb[0].mxu0 %v915
      %v1030 = vpop.f32.mrb[0].mxu0
      %v1031 = vadd.f32 %v909, %v1030
      %v1032 = vpop.f32.mrb[0].mxu0
      %1033 = vmatprep.mubr.f32.mxu0 0.0
      %1034 = vmatmul.mubr.f32.gmra.mrb[0].mxu0 %v918
      %v1035 = vpop.f32.mrb[0].mxu0
      %v1036 = vadd.f32 %v909, %v1035
      %v1037 = vpop.f32.mrb[0].mxu0
      %1038 = vmatprep.mubr.f32.mxu0 0.0
      %1039 = vmatmul.mubr.f32.gmra.mrb[0].mxu0 %v921
      %v1040 = vpop.f32.mrb[0].mxu0
      %v1041 = vadd.f32 %v909, %v1040
      %v1042 = vpop.f32.mrb[0].mxu0
      %1043 = vmatprep.mubr.f32.mxu0 0.0
      %1044 = vmatmul.mubr.f32.gmra.mrb[0].mxu0 %v924
      %v1045 = vpop.f32.mrb[0].mxu0
      %v1046 = vadd.f32 %v909, %v1045
      %v1047 = vpop.f32.mrb[0].mxu0
      %1048 = vmatprep.mubr.f32.mxu0 0.0
      %1049 = vmatmul.mubr.f32.gmra.mrb[0].mxu0 %v927
      %v1050 = vpop.f32.mrb[0].mxu0
      %v1051 = vadd.f32 %v909, %v1050
      %v1052 = vpop.f32.mrb[0].mxu0
      %1053 = vmatprep.mubr.f32.mxu0 0.0
      %1054 = vmatmul.mubr.f32.gmra.mrb[0].mxu0 %v930
      %v1055 = vpop.f32.mrb[0].mxu0
      %v1056 = vadd.f32 %v909, %v1055
      %v1057 = vpop.f32.mrb[0].mxu0
      %1058 = vmatprep.mubr.f32.mxu0 0.0
      %1059 = vmatmul.mubr.f32.gmra.mrb[0].mxu0 %v933
      %v1060 = vpop.f32.mrb[0].mxu0
      %v1061 = vadd.f32 %v909, %v1060
      %v1062 = vpop.f32.mrb[0].mxu0
      %1063 = vmatprep.mubr.f32.mxu0 0.0
      %1064 = vmatmul.mubr.f32.gmra.mrb[0].mxu0 %v936
      %v1065 = vpop.f32.mrb[0].mxu0
      %v1066 = vadd.f32 %v909, %v1065
      %v1067 = vpop.f32.mrb[0].mxu0
      %1068 = vmatprep.mubr.f32.mxu0 0.0
      %1069 = vmatmul.mubr.f32.gmra.mrb[0].mxu0 %v939
      %v1070 = vpop.f32.mrb[0].mxu0
      %v1071 = vadd.f32 %v909, %v1070
      %v1072 = vpop.f32.mrb[0].mxu0
      %1073 = vmatprep.mubr.f32.mxu0 0.0
      %1074 = vmatmul.mubr.f32.gmra.mrb[0].mxu0 %v942
      %v1075 = vpop.f32.mrb[0].mxu0
      %v1076 = vadd.f32 %v909, %v1075
      %v1077 = vpop.f32.mrb[0].mxu0
      %1078 = vmatprep.mubr.f32.mxu0 0.0
      %1079 = vmatmul.mubr.f32.gmra.mrb[0].mxu0 %v945
      %v1080 = vpop.f32.mrb[0].mxu0
      %v1081 = vadd.f32 %v909, %v1080
      %v1082 = vpop.f32.mrb[0].mxu0
      %1083 = vmatprep.mubr.f32.mxu0 0.0
      %1084 = vmatmul.mubr.f32.gmra.mrb[0].mxu0 %v948
      %v1085 = vpop.f32.mrb[0].mxu0
      %v1086 = vadd.f32 %v909, %v1085
      %v1087 = vpop.f32.mrb[0].mxu0
      %1088 = vmatprep.mubr.f32.mxu0 0.0
      %1089 = vmatmul.mubr.f32.gmra.mrb[0].mxu0 %v951
      %v1090 = vpop.f32.mrb[0].mxu0
      %v1091 = vadd.f32 %v909, %v1090
      %v1092 = vpop.f32.mrb[0].mxu0
      %1093 = vmatprep.mubr.f32.mxu0 0.0
      %1094 = vmatmul.mubr.f32.gmra.mrb[0].mxu0 %v954
      %v1095 = vpop.f32.mrb[0].mxu0
      %v1096 = vadd.f32 %v909, %v1095
      %v1097 = vpop.f32.mrb[0].mxu0
      %1098 = vmatprep.mubr.f32.mxu0 0.0
      %1099 = vmatmul.mubr.f32.gmra.mrb[0].mxu0 %v957
      %v1100 = vpop.f32.mrb[0].mxu0
      %v1101 = vadd.f32 %v909, %v1100
      %v1102 = vpop.f32.mrb[0].mxu0
      %1103 = vdwg.mxu0
      %v1104 = vxor.u32 %v1026, 2147483648
      %v1105 = vxor.u32 %v1031, 2147483648
      %v1106 = vxor.u32 %v1036, 2147483648
      %v1107 = vxor.u32 %v1041, 2147483648
      %v1108 = vxor.u32 %v1046, 2147483648
      %v1109 = vxor.u32 %v1051, 2147483648
      %v1110 = vxor.u32 %v1056, 2147483648
      %v1111 = vxor.u32 %v1061, 2147483648
      %v1112 = vxor.u32 %v1066, 2147483648
      %v1113 = vxor.u32 %v1071, 2147483648
      %v1114 = vxor.u32 %v1076, 2147483648
      %v1115 = vxor.u32 %v1081, 2147483648
      %v1116 = vxor.u32 %v1086, 2147483648
      %v1117 = vxor.u32 %v1091, 2147483648
      %v1118 = vxor.u32 %v1096, 2147483648
      %v1119 = vxor.u32 %v1101, 2147483648
      %v1120 = vmul.f32 %v1104, 1.442695
      %v1121 = vpow.pop %v1120
      %v1122 = vmul.f32 %v1105, 1.442695
      %v1123 = vpow.pop %v1122
      %v1124 = vmul.f32 %v1106, 1.442695
      %v1125 = vpow.pop %v1124
      %v1126 = vmul.f32 %v1107, 1.442695
      %v1127 = vpow.pop %v1126
      %v1128 = vmul.f32 %v1108, 1.442695
      %v1129 = vpow.pop %v1128
      %v1130 = vmul.f32 %v1109, 1.442695
      %v1131 = vpow.pop %v1130
      %v1132 = vmul.f32 %v1110, 1.442695
      %v1133 = vpow.pop %v1132
      %v1134 = vmul.f32 %v1111, 1.442695
      %v1135 = vpow.pop %v1134
      %v1136 = vmul.f32 %v1112, 1.442695
      %v1137 = vpow.pop %v1136
      %v1138 = vmul.f32 %v1113, 1.442695
      %v1139 = vpow.pop %v1138
      %v1140 = vmul.f32 %v1114, 1.442695
      %v1141 = vpow.pop %v1140
      %v1142 = vmul.f32 %v1115, 1.442695
      %v1143 = vpow.pop %v1142
      %v1144 = vmul.f32 %v1116, 1.442695
      %v1145 = vpow.pop %v1144
      %v1146 = vmul.f32 %v1117, 1.442695
      %v1147 = vpow.pop %v1146
      %v1148 = vmul.f32 %v1118, 1.442695
      %v1149 = vpow.pop %v1148
      %v1150 = vmul.f32 %v1119, 1.442695
      %v1151 = vpow.pop %v1150
      %v1152 = vadd.f32 %v1121, 1.0
      %v1153 = vadd.f32 %v1123, 1.0
      %v1154 = vadd.f32 %v1125, 1.0
      %v1155 = vadd.f32 %v1127, 1.0
      %v1156 = vadd.f32 %v1129, 1.0
      %v1157 = vadd.f32 %v1131, 1.0
      %v1158 = vadd.f32 %v1133, 1.0
      %v1159 = vadd.f32 %v1135, 1.0
      %v1160 = vadd.f32 %v1137, 1.0
      %v1161 = vadd.f32 %v1139, 1.0
      %v1162 = vadd.f32 %v1141, 1.0
      %v1163 = vadd.f32 %v1143, 1.0
      %v1164 = vadd.f32 %v1145, 1.0
      %v1165 = vadd.f32 %v1147, 1.0
      %v1166 = vadd.f32 %v1149, 1.0
      %v1167 = vadd.f32 %v1151, 1.0
      %v1168 = vrcp.pop %v1152
      %v1169 = vmul.f32 1.0, %v1168
      %v1170 = vrcp.pop %v1153
      %v1171 = vmul.f32 1.0, %v1170
      %v1172 = vrcp.pop %v1154
      %v1173 = vmul.f32 1.0, %v1172
      %v1174 = vrcp.pop %v1155
      %v1175 = vmul.f32 1.0, %v1174
      %v1176 = vrcp.pop %v1156
      %v1177 = vmul.f32 1.0, %v1176
      %v1178 = vrcp.pop %v1157
      %v1179 = vmul.f32 1.0, %v1178
      %v1180 = vrcp.pop %v1158
      %v1181 = vmul.f32 1.0, %v1180
      %v1182 = vrcp.pop %v1159
      %v1183 = vmul.f32 1.0, %v1182
      %v1184 = vrcp.pop %v1160
      %v1185 = vmul.f32 1.0, %v1184
      %v1186 = vrcp.pop %v1161
      %v1187 = vmul.f32 1.0, %v1186
      %v1188 = vrcp.pop %v1162
      %v1189 = vmul.f32 1.0, %v1188
      %v1190 = vrcp.pop %v1163
      %v1191 = vmul.f32 1.0, %v1190
      %v1192 = vrcp.pop %v1164
      %v1193 = vmul.f32 1.0, %v1192
      %v1194 = vrcp.pop %v1165
      %v1195 = vmul.f32 1.0, %v1194
      %v1196 = vrcp.pop %v1166
      %v1197 = vmul.f32 1.0, %v1196
      %v1198 = vrcp.pop %v1167
      %v1199 = vmul.f32 1.0, %v1198
      %vm1200 = vcmask 7168
      %1201 = vst.msk [vmem:[%s282] sm:$0xff] %vm1200, %v1169
      %1202 = vst.msk [vmem:[%s282 + $0x8] sm:$0xff] %vm1200, %v1171
      %1203 = vst.msk [vmem:[%s282 + $0x10] sm:$0xff] %vm1200, %v1173
      %1204 = vst.msk [vmem:[%s282 + $0x18] sm:$0xff] %vm1200, %v1175
      %1205 = vst.msk [vmem:[%s282 + $0x20] sm:$0xff] %vm1200, %v1177
      %1206 = vst.msk [vmem:[%s282 + $0x28] sm:$0xff] %vm1200, %v1179
      %1207 = vst.msk [vmem:[%s282 + $0x30] sm:$0xff] %vm1200, %v1181
      %1208 = vst.msk [vmem:[%s282 + $0x38] sm:$0xff] %vm1200, %v1183
      %1209 = vst.msk [vmem:[%s282 + $0x40] sm:$0xff] %vm1200, %v1185
      %1210 = vst.msk [vmem:[%s282 + $0x48] sm:$0xff] %vm1200, %v1187
      %1211 = vst.msk [vmem:[%s282 + $0x50] sm:$0xff] %vm1200, %v1189
      %1212 = vst.msk [vmem:[%s282 + $0x58] sm:$0xff] %vm1200, %v1191
      %1213 = vst.msk [vmem:[%s282 + $0x60] sm:$0xff] %vm1200, %v1193
      %1214 = vst.msk [vmem:[%s282 + $0x68] sm:$0xff] %vm1200, %v1195
      %1215 = vst.msk [vmem:[%s282 + $0x70] sm:$0xff] %vm1200, %v1197
      %1216 = vst.msk [vmem:[%s282 + $0x78] sm:$0xff] %vm1200, %v1199
      %s1217 = smul.u32 16, %s20
      %p1218 = scmp.lt.s32.totalorder %s1217, 31
      %s1219 = scalar_select %p1218, %s1217, 31
      %s1220 = smul.addr %s1219, 8
      %s1221 = scalar_lea.vmem %s7, %s1220
      // Predicated region
      $region49: #{discriminator_forward.1} parent=47 // pred_check
        %p1222 = pneg %p190
      $region50: #{discriminator_forward.1} parent=47 // pred_check_branch
        %1224 = sbr.rel (%p1222) target = $region52
      $region51: #{discriminator_forward.1} parent=47 // pred_region
        %s1225 = smul.u32 16, %s20
      $region52: #{discriminator_forward.1} parent=47 // pred_fallthru
        _
    $region48: #{discriminator_forward.1} parent=5 // pred_fallthru
      _
    %p1226 = scmp.le.s32.totalorder 2, %s15
    // Predicated region
    $region53: #{discriminator_forward.1} parent=5 // pred_check
      %p1227 = pneg %p1226
    $region54: #{discriminator_forward.1} parent=5 // pred_check_branch
      %1229 = sbr.rel (%p1227) target = $region56
    $region55: #{discriminator_forward.1} parent=5 // pred_region
      %s1230 = ssub.s32 %s15, 2
      // Predicated region
      $region57: #{discriminator_forward.1} parent=55 // pred_check
        %p1231 = pneg %p196
      $region58: #{discriminator_forward.1} parent=55 // pred_check_branch
        %1233 = sbr.rel (%p1231) target = $region60
      $region59: #{discriminator_forward.1} parent=55 // pred_region
        %s1234 = smul.u32 16, %s21
        %p1235 = scmp.lt.s32.totalorder %s1234, 31
        %s1236 = scalar_select %p1235, %s1234, 31
        %s1237 = smul.addr %s1236, 8
        %s1238 = scalar_lea.vmem %s7, %s1237
      $region60: #{discriminator_forward.1} parent=55 // pred_fallthru
        _
    $region56: #{discriminator_forward.1} parent=5 // pred_fallthru
      _
  $region6: #{discriminator_forward.1} parent=0 // loop_footer
    %s19 = sadd.s32 1, %s15
  $region7: #{discriminator_forward.1} parent=0 // loop_footer_branch
    %14 = sbr.rel target = $region3
  $region8: #{discriminator_forward.1} parent=0 // loop_exit
    _

</llo_original>
